<compile_context>
chip_gen: v7x
topology: tpu7x:2x2x1
jax: 0.10.0
libtpu: 0.0.40
codegen_flags: <defaults>
</compile_context>

<pallas_src>
import functools

import jax
import jax.numpy as jnp
from jax.experimental import pallas as pl
from jax.experimental.pallas import tpu as pltpu


def _round_up(x, m):
    return ((x + m - 1) // m) * m


# ----------------------------------------------------------------------------
# Kernel 1: fused relation + entity classification heads
#   pooled[n,h] = (1/S) * sum_s hidden[n,s,h]        (XLU sublane reduce, done FIRST)
#   x[n]        = sum_h pooled[n,h] * w[h] + b       (VPU mult + XLU lane reduce)
#   per-row BCE-with-logits terms are written out; the mean over N is a trivial XLA op.
# Grid: (N tiles,)   -- N axis "parallel" (megacore-shardable on v7x).
# ----------------------------------------------------------------------------
def _fused_cls_kernel(rel_h_ref, ent_h_ref, rel_y_ref, ent_y_ref, w_ref, b_ref,
                      rel_logit_ref, ent_logit_ref, rel_per_ref, ent_per_ref,
                      *, inv_s_rel, inv_s_ent):
    w = w_ref[...].astype(jnp.float32)          # (1, H)
    b = b_ref[...].astype(jnp.float32)          # (1, 1)

    def head(h_ref, y_ref, logit_ref, per_ref, inv_s):
        h = h_ref[...].astype(jnp.float32)                  # (tn, S, H)
        pooled = jnp.sum(h, axis=1) * inv_s                 # (tn, H)  -- reduce over S first
        x = jnp.sum(pooled * w, axis=-1, keepdims=True) + b  # (tn, 1)  -- Linear(H,1)
        y = y_ref[...].astype(jnp.float32)                  # (tn, 1)
        # BCEWithLogitsLoss per element (numerically stable):
        per = jnp.maximum(x, 0.0) - x * y + jnp.log1p(jnp.exp(-jnp.abs(x)))
        logit_ref[...] = x
        per_ref[...] = per

    head(rel_h_ref, rel_y_ref, rel_logit_ref, rel_per_ref, inv_s_rel)
    head(ent_h_ref, ent_y_ref, ent_logit_ref, ent_per_ref, inv_s_ent)


def _pick_cls_tile(N, S_rel, S_ent, H, itemsize, budget_bytes=32 * 1024 * 1024):
    """Pick the N-tile so the double-buffered hidden tiles of BOTH heads fit the budget."""
    per_row = 2 * (S_rel + S_ent) * H * max(int(itemsize), 2)   # 2x for double buffering
    tn = (budget_bytes // per_row) // 8 * 8
    tn = max(8, min(128, tn, _round_up(N, 8)))
    return int(tn)


def fused_cls_heads(rel_hidden, rel_labels, ent_hidden, ent_labels, cls_w, cls_b):
    """Both classification heads in ONE pallas_call (shared cls_layer weights).

    rel_hidden: [N, S_rel, H] (bf16 or f32), ent_hidden: [N, S_ent, H],
    labels: [N] in {0,1}, cls_w: [1, H], cls_b: [1].
    Returns (rel_logits[N], ent_logits[N], rel_bce_loss, ent_bce_loss).
    """
    N, S_rel, H = rel_hidden.shape
    N2, S_ent, H2 = ent_hidden.shape
    assert N == N2 and H == H2

    tn = _pick_cls_tile(N, S_rel, S_ent, H, jnp.dtype(rel_hidden.dtype).itemsize)
    Np = _round_up(N, tn)
    if Np != N:
        pad = Np - N
        rel_hidden = jnp.pad(rel_hidden, ((0, pad), (0, 0), (0, 0)))
        ent_hidden = jnp.pad(ent_hidden, ((0, pad), (0, 0), (0, 0)))
        rel_labels = jnp.pad(rel_labels, ((0, pad),))
        ent_labels = jnp.pad(ent_labels, ((0, pad),))
    rel_y = rel_labels.reshape(Np, 1).astype(jnp.float32)
    ent_y = ent_labels.reshape(Np, 1).astype(jnp.float32)
    w = cls_w.reshape(1, H).astype(jnp.float32)     # tiny parameter, cast is negligible
    b = cls_b.reshape(1, 1).astype(jnp.float32)

    kernel = functools.partial(_fused_cls_kernel,
                               inv_s_rel=1.0 / S_rel, inv_s_ent=1.0 / S_ent)
    out_blk = pl.BlockSpec((tn, 1), lambda i: (i, 0))

    rel_logits, ent_logits, rel_per, ent_per = pl.pallas_call(
        kernel,
        out_shape=tuple(jax.ShapeDtypeStruct((Np, 1), jnp.float32) for _ in range(4)),
        grid_spec=pltpu.PrefetchScalarGridSpec(
            num_scalar_prefetch=0,
            grid=(Np // tn,),
            in_specs=[
                pl.BlockSpec((tn, S_rel, H), lambda i: (i, 0, 0)),   # relation encoder hidden tile
                pl.BlockSpec((tn, S_ent, H), lambda i: (i, 0, 0)),   # entity encoder hidden tile
                pl.BlockSpec((tn, 1), lambda i: (i, 0)),             # relation labels
                pl.BlockSpec((tn, 1), lambda i: (i, 0)),             # entity labels
                pl.BlockSpec((1, H), lambda i: (0, 0)),              # shared cls weight (resident)
                pl.BlockSpec((1, 1), lambda i: (0, 0)),              # shared cls bias
            ],
            out_specs=(out_blk, out_blk, out_blk, out_blk),
        ),
        compiler_params=pltpu.CompilerParams(
            dimension_semantics=("parallel",),
            vmem_limit_bytes=48 * 1024 * 1024,
        ),
    )(rel_hidden, ent_hidden, rel_y, ent_y, w, b)

    rel_loss = jnp.mean(rel_per[:N, 0])
    ent_loss = jnp.mean(ent_per[:N, 0])
    # Logits are what the PyTorch module feeds into the (string-level) candidate filtering.
    return rel_logits[:N, 0], ent_logits[:N, 0], rel_loss, ent_loss


# ----------------------------------------------------------------------------
# Kernel 2: generation loss — lm_head matmul + token CE (ignore_index = -100)
# Grid: (BT tiles "parallel", V tiles "arbitrary").  Online logsumexp over V tiles
# with running max / sum / picked-logit accumulators in VMEM scratch; the decoder
# hidden tile and label tile stay resident across the V reduction; weight tiles
# stream in bf16 and are double-buffered behind the MXU.
# ----------------------------------------------------------------------------
def _ce_vocab_tiles(V, tv_max=4096):
    # tv capped at 4096 so the double-buffered (H, tv) bf16 weight tile + (tbt, tv) f32
    # logits stay well inside v7x's 64 MiB/TC VMEM; also fine on v5e/v6e.
    tv = min(tv_max, _round_up(V, 128))
    Vp = _round_up(V, tv)
    return tv, Vp


def _lm_ce_kernel(lab_ref, h_ref, w_ref, per_ref, m_sc, l_sc, p_sc, *, tv, v_limit):
    j = pl.program_id(1)
    nv = pl.num_programs(1)

    @pl.when(j == 0)
    def _():
        m_sc[...] = jnp.full_like(m_sc, -jnp.inf)
        l_sc[...] = jnp.zeros_like(l_sc)
        p_sc[...] = jnp.zeros_like(p_sc)

    # bf16 x bf16 on the MXU, f32 accumulation; logits tile never leaves VMEM.
    logits = jnp.dot(h_ref[...], w_ref[...], preferred_element_type=jnp.float32)  # (tbt, tv)
    labels = lab_ref[...]                                                          # (tbt, 1) int32

    # Loop-invariant (1, tv) lane index — no materialized (tbt, tv) int32 index tile.
    lane = jax.lax.broadcasted_iota(jnp.int32, (1, tv), 1)

    if v_limit is not None:
        # Mask padded vocab columns. The (1, tv) condition is all-true on every tile
        # except the last one (where the padding actually lives), so the select is a
        # cheap row-broadcast rather than a full index-tile computation.
        logits = jnp.where(lane < (v_limit - j * tv), logits, -1e30)

    # picked (target) logit for this V tile — broadcast compare, no one-hot.
    # NOTE: a label >= V silently contributes 0 here (PyTorch would raise).
    hit = lane == (labels - j * tv)
    p_sc[...] += jnp.sum(jnp.where(hit, logits, 0.0), axis=-1, keepdims=True)

    # online logsumexp across V tiles (all f32, EUP exp / XLU reductions).
    m_new = jnp.maximum(m_sc[...], jnp.max(logits, axis=-1, keepdims=True))
    l_sc[...] = (l_sc[...] * jnp.exp(m_sc[...] - m_new)
                 + jnp.sum(jnp.exp(logits - m_new), axis=-1, keepdims=True))
    m_sc[...] = m_new

    @pl.when(j == nv - 1)
    def _():
        valid = labels != -100
        lse = m_sc[...] + jnp.log(l_sc[...])
        per_ref[...] = jnp.where(valid, lse - p_sc[...], 0.0)


def lm_head_cross_entropy(decoder_hidden, lm_head_w, gen_labels, *, vocab_size=None,
                          tbt=256, tv_max=4096):
    """decoder_hidden: [B, T, H] (bf16), lm_head_w: [H, Vp] (bf16, ideally pre-padded),
    gen_labels: [B, T] int32 (-100 = ignore).  vocab_size = real (unpadded) vocab."""
    B, T, H = decoder_hidden.shape
    H2, Wv = lm_head_w.shape
    assert H == H2
    V = Wv if vocab_size is None else vocab_size
    tv, Vp = _ce_vocab_tiles(V, tv_max)

    BT = B * T
    h = decoder_hidden.reshape(BT, H)
    labels = gen_labels.reshape(BT, 1).astype(jnp.int32)

    tbt = min(tbt, _round_up(BT, 8))
    BTp = _round_up(BT, tbt)
    if BTp != BT:
        h = jnp.pad(h, ((0, BTp - BT), (0, 0)))
        labels = jnp.pad(labels, ((0, BTp - BT), (0, 0)), constant_values=-100)

    w = lm_head_w
    if Wv < Vp:
        # Fallback only — the model stores the weight pre-padded so this copy never runs.
        w = jnp.pad(w, ((0, 0), (0, Vp - Wv)))
    elif Wv > Vp:
        w = w[:, :Vp]

    kernel = functools.partial(_lm_ce_kernel, tv=tv, v_limit=(V if Vp != V else None))

    per_tok = pl.pallas_call(
        kernel,
        out_shape=jax.ShapeDtypeStruct((BTp, 1), jnp.float32),
        grid_spec=pltpu.PrefetchScalarGridSpec(
            num_scalar_prefetch=0,
            grid=(BTp // tbt, Vp // tv),
            in_specs=[
                pl.BlockSpec((tbt, 1), lambda i, j: (i, 0)),   # labels — resident across V tiles
                pl.BlockSpec((tbt, H), lambda i, j: (i, 0)),   # decoder hidden tile (bf16)
                pl.BlockSpec((H, tv), lambda i, j: (0, j)),    # lm_head weight tile (bf16 stream)
            ],
            out_specs=pl.BlockSpec((tbt, 1), lambda i, j: (i, 0)),  # per-token loss
            scratch_shapes=[
                pltpu.VMEM((tbt, 1), jnp.float32),             # running max
                pltpu.VMEM((tbt, 1), jnp.float32),             # running sum-exp
                pltpu.VMEM((tbt, 1), jnp.float32),             # picked (target) logit
            ],
        ),
        compiler_params=pltpu.CompilerParams(
            dimension_semantics=("parallel", "arbitrary"),
            vmem_limit_bytes=48 * 1024 * 1024,
        ),
    )(labels, h, w)

    total = jnp.sum(per_tok)
    # Valid-token count is trivial; compute it in XLA instead of a second kernel output.
    n_valid = jnp.sum((gen_labels.reshape(-1) != -100).astype(jnp.float32))
    # NOTE: if every label is -100 PyTorch CrossEntropyLoss returns NaN (0/0);
    # here the denominator is clamped to 1 and the loss is 0 (documented divergence).
    return total / jnp.maximum(n_valid, 1.0)


# ----------------------------------------------------------------------------
# Module wrapper
# ----------------------------------------------------------------------------
@functools.partial(jax.jit, static_argnames=("vocab_size",))
def _total_loss(cls_w, cls_b, lm_head_w, rel_h, rel_y, ent_h, ent_y, dec_h, gen_y,
                *, vocab_size):
    _, _, rel_loss, ent_loss = fused_cls_heads(rel_h, rel_y, ent_h, ent_y, cls_w, cls_b)
    gen_loss = lm_head_cross_entropy(dec_h, lm_head_w, gen_y, vocab_size=vocab_size)
    return gen_loss + ent_loss + rel_loss


class T5MultiTaskRelationEntityConcatPallas:
    """Numeric forward path of T5_MultiTask_Relation_Entity_Concat (BCE variant,
    cross_entropy_loss=False). A single shared cls_layer Linear(H,1) serves both
    the relation and entity heads, exactly as in the PyTorch module."""

    def __init__(self, hidden_size, vocab_size, sample_size=10, key=None):
        self.hidden_size = hidden_size
        self.vocab_size = vocab_size
        self.sample_size = sample_size
        key = key if key is not None else jax.random.PRNGKey(0)
        k1, k2, k3 = jax.random.split(key, 3)
        bound = 1.0 / float(hidden_size) ** 0.5
        # nn.Linear(hidden_size, 1): weight (1, H), bias (1,)
        self.cls_w = jax.random.uniform(k1, (1, hidden_size), jnp.float32, -bound, bound)
        self.cls_b = jax.random.uniform(k2, (1,), jnp.float32, -bound, bound)
        # T5 lm_head stand-in (no bias), stored [H, Vp] in bf16 (native weight-stream dtype),
        # zero-padded ONCE to the V-tile multiple so no per-call pad of the big weight.
        w = (jax.random.normal(k3, (hidden_size, vocab_size), jnp.float32)
             * 0.02).astype(jnp.bfloat16)
        _, Vp = _ce_vocab_tiles(vocab_size)
        if Vp != vocab_size:
            w = jnp.pad(w, ((0, 0), (0, Vp - vocab_size)))
        self.lm_head_w = w

    def forward(self,
                relation_clf_hidden,     # [B*sample_size, S_rel, H]  (t5.encoder last_hidden_state)
                relation_clf_labels,     # [B*sample_size] float {0,1}
                entity_clf_hidden,       # [B*sample_size, S_ent, H]
                entity_clf_labels,       # [B*sample_size] float {0,1}
                decoder_hidden,          # [B, T_dec, H]  (t5 decoder last hidden, pre lm_head)
                gen_labels):             # [B, T_dec] int32, -100 = ignore
        return _total_loss(self.cls_w, self.cls_b, self.lm_head_w,
                           relation_clf_hidden, relation_clf_labels,
                           entity_clf_hidden, entity_clf_labels,
                           decoder_hidden, gen_labels,
                           vocab_size=self.vocab_size)


# ----------------------------------------------------------------------------
# Pure-JAX reference for verification
# ----------------------------------------------------------------------------
def _ref_total_loss(cls_w, cls_b, lm_head_w, rel_h, rel_y, ent_h, ent_y, dec_h, gen_y):
    def cls_loss(h, y):
        pooled = jnp.mean(h.astype(jnp.float32), axis=1)                   # [N, H]
        x = pooled @ cls_w.astype(jnp.float32).T + cls_b                   # [N, 1]
        y = y.reshape(-1, 1).astype(jnp.float32)
        per = jnp.maximum(x, 0.0) - x * y + jnp.log1p(jnp.exp(-jnp.abs(x)))
        return jnp.mean(per)

    def gen_loss(h, labels):
        Bd, Td, Hd = h.shape
        logits = jnp.dot(h.reshape(Bd * Td, Hd), lm_head_w,
                         preferred_element_type=jnp.float32)               # [BT, V]
        labels = labels.reshape(-1)
        valid = labels != -100
        safe = jnp.where(valid, labels, 0)
        lse = jax.scipy.special.logsumexp(logits, axis=-1)
        picked = jnp.take_along_axis(logits, safe[:, None], axis=-1)[:, 0]
        per = (lse - picked) * valid
        return jnp.sum(per) / jnp.maximum(jnp.sum(valid.astype(jnp.float32)), 1.0)

    return gen_loss(dec_h, gen_y) + cls_loss(ent_h, ent_y) + cls_loss(rel_h, rel_y)


# ----------------------------------------------------------------------------
if __name__ == "__main__":
    B = 2              # batch (input_ids_gen.size(0))
    sample_size = 4    # candidates per example
    N = B * sample_size
    S_rel, S_ent = 8, 10
    H = 128            # hidden_size (small stand-in for 768)
    T_dec = 6
    V = 200            # vocab (small stand-in for 32128; deliberately NOT 128-aligned)

    key = jax.random.PRNGKey(0)
    k_model, k1, k2, k3, k4, k5, k6 = jax.random.split(key, 7)

    model = T5MultiTaskRelationEntityConcatPallas(H, V, sample_size=sample_size, key=k_model)

    # Synthetic encoder/decoder hidden states (bf16, native activation dtype —
    # no wrapper-side f32 copies of the big tensors).
    rel_hidden = jax.random.normal(k1, (N, S_rel, H), jnp.float32).astype(jnp.bfloat16)
    ent_hidden = jax.random.normal(k2, (N, S_ent, H), jnp.float32).astype(jnp.bfloat16)
    dec_hidden = jax.random.normal(k3, (B, T_dec, H), jnp.float32).astype(jnp.bfloat16)
    rel_labels = jax.random.bernoulli(k4, 0.4, (N,)).astype(jnp.float32)
    ent_labels = jax.random.bernoulli(k5, 0.4, (N,)).astype(jnp.float32)
    gen_labels = jax.random.randint(k6, (B, T_dec), 0, V, jnp.int32)
    gen_labels = gen_labels.at[:, -1].set(-100)   # some ignored (padding) positions

    total_loss = model.forward(rel_hidden, rel_labels, ent_hidden, ent_labels,
                               dec_hidden, gen_labels)
    total_loss = jax.block_until_ready(total_loss)

    ref = _ref_total_loss(model.cls_w, model.cls_b, model.lm_head_w[:, :V],
                          rel_hidden, rel_labels, ent_hidden, ent_labels,
                          dec_hidden, gen_labels)
    assert jnp.allclose(total_loss, ref, rtol=1e-3, atol=1e-3), (total_loss, ref)

    print("KERNEL_OK")
</pallas_src>

<mosaic_0001>
module attributes {stable_mosaic.version = 11 : i64} {
  func.func @_fused_cls_kernel(%arg0: i32, %arg1: memref<8x8x128xbf16, #tpu.memory_space<vmem>>, %arg2: memref<8x10x128xbf16, #tpu.memory_space<vmem>>, %arg3: memref<8x1xf32, #tpu.memory_space<vmem>>, %arg4: memref<8x1xf32, #tpu.memory_space<vmem>>, %arg5: memref<1x128xf32, #tpu.memory_space<vmem>>, %arg6: memref<1x1xf32, #tpu.memory_space<vmem>>, %arg7: memref<8x1xf32, #tpu.memory_space<vmem>>, %arg8: memref<8x1xf32, #tpu.memory_space<vmem>>, %arg9: memref<8x1xf32, #tpu.memory_space<vmem>>, %arg10: memref<8x1xf32, #tpu.memory_space<vmem>>) attributes {dimension_semantics = [#tpu.dimension_semantics<parallel>], iteration_bounds = array<i64: 1>, scalar_prefetch = 0 : i64, scratch_operands = 0 : i64, tpu.core_type = #tpu.core_type<tc>, window_params = [{transform_indices = @transform_0, window_bounds = array<i64: 8, 8, 128>}, {transform_indices = @transform_1, window_bounds = array<i64: 8, 10, 128>}, {transform_indices = @transform_2, window_bounds = array<i64: 8, 1>}, {transform_indices = @transform_3, window_bounds = array<i64: 8, 1>}, {pipeline_mode = #tpu.pipeline_mode<synchronous>, transform_indices = @transform_4, window_bounds = array<i64: 1, 128>}, {pipeline_mode = #tpu.pipeline_mode<synchronous>, transform_indices = @transform_5, window_bounds = array<i64: 1, 1>}, {transform_indices = @transform_6, window_bounds = array<i64: 8, 1>}, {transform_indices = @transform_7, window_bounds = array<i64: 8, 1>}, {transform_indices = @transform_8, window_bounds = array<i64: 8, 1>}, {transform_indices = @transform_9, window_bounds = array<i64: 8, 1>}]} {
    %c0 = arith.constant 0 : index
    %c0_0 = arith.constant 0 : index
    %0 = vector.load %arg5[%c0, %c0_0] : memref<1x128xf32, #tpu.memory_space<vmem>>, vector<1x128xf32>
    %c0_1 = arith.constant 0 : index
    %c0_2 = arith.constant 0 : index
    %1 = vector.load %arg6[%c0_1, %c0_2] : memref<1x1xf32, #tpu.memory_space<vmem>>, vector<1x1xf32>
    %c0_3 = arith.constant 0 : index
    %c0_4 = arith.constant 0 : index
    %c0_5 = arith.constant 0 : index
    %2 = vector.load %arg1[%c0_3, %c0_4, %c0_5] : memref<8x8x128xbf16, #tpu.memory_space<vmem>>, vector<8x8x128xbf16>
    %3 = arith.extf %2 : vector<8x8x128xbf16> to vector<8x8x128xf32>
    %cst = arith.constant dense<0.000000e+00> : vector<8x128xf32>
    %4 = vector.multi_reduction <add>, %3, %cst [1] : vector<8x8x128xf32> to vector<8x128xf32>
    %cst_6 = arith.constant 1.250000e-01 : f32
    %5 = vector.broadcast %cst_6 : f32 to vector<8x128xf32>
    %6 = arith.mulf %4, %5 : vector<8x128xf32>
    %7 = vector.broadcast %0 : vector<1x128xf32> to vector<8x128xf32>
    %8 = arith.mulf %6, %7 : vector<8x128xf32>
    %cst_7 = arith.constant dense<0.000000e+00> : vector<8xf32>
    %9 = vector.multi_reduction <add>, %8, %cst_7 [1] : vector<8x128xf32> to vector<8xf32>
    %10 = vector.shape_cast %9 : vector<8xf32> to vector<8x1xf32>
    %11 = vector.broadcast %1 : vector<1x1xf32> to vector<8x1xf32>
    %12 = arith.addf %10, %11 : vector<8x1xf32>
    %c0_8 = arith.constant 0 : index
    %c0_9 = arith.constant 0 : index
    %13 = vector.load %arg3[%c0_8, %c0_9] : memref<8x1xf32, #tpu.memory_space<vmem>>, vector<8x1xf32>
    %cst_10 = arith.constant 0.000000e+00 : f32
    %14 = vector.broadcast %cst_10 : f32 to vector<8x1xf32>
    %15 = arith.maximumf %12, %14 : vector<8x1xf32>
    %16 = arith.mulf %12, %13 : vector<8x1xf32>
    %17 = arith.subf %15, %16 : vector<8x1xf32>
    %18 = math.absf %12 : vector<8x1xf32>
    %cst_11 = arith.constant 0.000000e+00 : f32
    %19 = vector.broadcast %cst_11 : f32 to vector<8x1xf32>
    %20 = arith.subf %19, %18 : vector<8x1xf32>
    %21 = math.exp %20 : vector<8x1xf32>
    %22 = math.log1p %21 : vector<8x1xf32>
    %23 = arith.addf %17, %22 : vector<8x1xf32>
    %c0_12 = arith.constant 0 : index
    %c0_13 = arith.constant 0 : index
    %24 = vector.load %arg7[%c0_12, %c0_13] : memref<8x1xf32, #tpu.memory_space<vmem>>, vector<8x1xf32>
    tpu.vector_store %arg7[%c0_12, %c0_13], %12 {strides = array<i32>} : memref<8x1xf32, #tpu.memory_space<vmem>>, vector<8x1xf32>,
    %c0_14 = arith.constant 0 : index
    %c0_15 = arith.constant 0 : index
    %25 = vector.load %arg9[%c0_14, %c0_15] : memref<8x1xf32, #tpu.memory_space<vmem>>, vector<8x1xf32>
    tpu.vector_store %arg9[%c0_14, %c0_15], %23 {strides = array<i32>} : memref<8x1xf32, #tpu.memory_space<vmem>>, vector<8x1xf32>,
    %c0_16 = arith.constant 0 : index
    %c0_17 = arith.constant 0 : index
    %c0_18 = arith.constant 0 : index
    %26 = vector.load %arg2[%c0_16, %c0_17, %c0_18] : memref<8x10x128xbf16, #tpu.memory_space<vmem>>, vector<8x10x128xbf16>
    %27 = arith.extf %26 : vector<8x10x128xbf16> to vector<8x10x128xf32>
    %cst_19 = arith.constant dense<0.000000e+00> : vector<8x128xf32>
    %28 = vector.multi_reduction <add>, %27, %cst_19 [1] : vector<8x10x128xf32> to vector<8x128xf32>
    %cst_20 = arith.constant 1.000000e-01 : f32
    %29 = vector.broadcast %cst_20 : f32 to vector<8x128xf32>
    %30 = arith.mulf %28, %29 : vector<8x128xf32>
    %31 = vector.broadcast %0 : vector<1x128xf32> to vector<8x128xf32>
    %32 = arith.mulf %30, %31 : vector<8x128xf32>
    %cst_21 = arith.constant dense<0.000000e+00> : vector<8xf32>
    %33 = vector.multi_reduction <add>, %32, %cst_21 [1] : vector<8x128xf32> to vector<8xf32>
    %34 = vector.shape_cast %33 : vector<8xf32> to vector<8x1xf32>
    %35 = vector.broadcast %1 : vector<1x1xf32> to vector<8x1xf32>
    %36 = arith.addf %34, %35 : vector<8x1xf32>
    %c0_22 = arith.constant 0 : index
    %c0_23 = arith.constant 0 : index
    %37 = vector.load %arg4[%c0_22, %c0_23] : memref<8x1xf32, #tpu.memory_space<vmem>>, vector<8x1xf32>
    %cst_24 = arith.constant 0.000000e+00 : f32
    %38 = vector.broadcast %cst_24 : f32 to vector<8x1xf32>
    %39 = arith.maximumf %36, %38 : vector<8x1xf32>
    %40 = arith.mulf %36, %37 : vector<8x1xf32>
    %41 = arith.subf %39, %40 : vector<8x1xf32>
    %42 = math.absf %36 : vector<8x1xf32>
    %cst_25 = arith.constant 0.000000e+00 : f32
    %43 = vector.broadcast %cst_25 : f32 to vector<8x1xf32>
    %44 = arith.subf %43, %42 : vector<8x1xf32>
    %45 = math.exp %44 : vector<8x1xf32>
    %46 = math.log1p %45 : vector<8x1xf32>
    %47 = arith.addf %41, %46 : vector<8x1xf32>
    %c0_26 = arith.constant 0 : index
    %c0_27 = arith.constant 0 : index
    %48 = vector.load %arg8[%c0_26, %c0_27] : memref<8x1xf32, #tpu.memory_space<vmem>>, vector<8x1xf32>
    tpu.vector_store %arg8[%c0_26, %c0_27], %36 {strides = array<i32>} : memref<8x1xf32, #tpu.memory_space<vmem>>, vector<8x1xf32>,
    %c0_28 = arith.constant 0 : index
    %c0_29 = arith.constant 0 : index
    %49 = vector.load %arg10[%c0_28, %c0_29] : memref<8x1xf32, #tpu.memory_space<vmem>>, vector<8x1xf32>
    tpu.vector_store %arg10[%c0_28, %c0_29], %47 {strides = array<i32>} : memref<8x1xf32, #tpu.memory_space<vmem>>, vector<8x1xf32>,
    return
  }
  func.func @transform_0(%arg0: i32) -> (i32, i32, i32) {
    %c0_i32 = arith.constant 0 : i32
    %c0_i32_0 = arith.constant 0 : i32
    %c0_i32_1 = arith.constant 0 : i32
    return %arg0, %c0_i32, %c0_i32_0 : i32, i32, i32
  }
  func.func @transform_1(%arg0: i32) -> (i32, i32, i32) {
    %c0_i32 = arith.constant 0 : i32
    %c0_i32_0 = arith.constant 0 : i32
    %c0_i32_1 = arith.constant 0 : i32
    return %arg0, %c0_i32, %c0_i32_0 : i32, i32, i32
  }
  func.func @transform_2(%arg0: i32) -> (i32, i32) {
    %c0_i32 = arith.constant 0 : i32
    %c0_i32_0 = arith.constant 0 : i32
    return %arg0, %c0_i32 : i32, i32
  }
  func.func @transform_3(%arg0: i32) -> (i32, i32) {
    %c0_i32 = arith.constant 0 : i32
    %c0_i32_0 = arith.constant 0 : i32
    return %arg0, %c0_i32 : i32, i32
  }
  func.func @transform_4(%arg0: i32) -> (i32, i32) {
    %c0_i32 = arith.constant 0 : i32
    %c0_i32_0 = arith.constant 0 : i32
    %c0_i32_1 = arith.constant 0 : i32
    return %c0_i32, %c0_i32_0 : i32, i32
  }
  func.func @transform_5(%arg0: i32) -> (i32, i32) {
    %c0_i32 = arith.constant 0 : i32
    %c0_i32_0 = arith.constant 0 : i32
    %c0_i32_1 = arith.constant 0 : i32
    return %c0_i32, %c0_i32_0 : i32, i32
  }
  func.func @transform_6(%arg0: i32) -> (i32, i32) {
    %c0_i32 = arith.constant 0 : i32
    %c0_i32_0 = arith.constant 0 : i32
    return %arg0, %c0_i32 : i32, i32
  }
  func.func @transform_7(%arg0: i32) -> (i32, i32) {
    %c0_i32 = arith.constant 0 : i32
    %c0_i32_0 = arith.constant 0 : i32
    return %arg0, %c0_i32 : i32, i32
  }
  func.func @transform_8(%arg0: i32) -> (i32, i32) {
    %c0_i32 = arith.constant 0 : i32
    %c0_i32_0 = arith.constant 0 : i32
    return %arg0, %c0_i32 : i32, i32
  }
  func.func @transform_9(%arg0: i32) -> (i32, i32) {
    %c0_i32 = arith.constant 0 : i32
    %c0_i32_0 = arith.constant 0 : i32
    return %arg0, %c0_i32 : i32, i32
  }
}

module attributes {stable_mosaic.version = 11 : i64} {
  func.func @_lm_ce_kernel(%arg0: i32, %arg1: i32, %arg2: memref<16x1xi32, #tpu.memory_space<vmem>>, %arg3: memref<16x128xbf16, #tpu.memory_space<vmem>>, %arg4: memref<128x256xbf16, #tpu.memory_space<vmem>>, %arg5: memref<16x1xf32, #tpu.memory_space<vmem>>, %arg6: memref<16x1xf32, #tpu.memory_space<vmem>>, %arg7: memref<16x1xf32, #tpu.memory_space<vmem>>, %arg8: memref<16x1xf32, #tpu.memory_space<vmem>>) attributes {dimension_semantics = [#tpu.dimension_semantics<parallel>, #tpu.dimension_semantics<arbitrary>], iteration_bounds = array<i64: 1, 1>, scalar_prefetch = 0 : i64, scratch_operands = 3 : i64, tpu.core_type = #tpu.core_type<tc>, window_params = [{transform_indices = @transform_0, window_bounds = array<i64: 16, 1>}, {transform_indices = @transform_1, window_bounds = array<i64: 16, 128>}, {transform_indices = @transform_2, window_bounds = array<i64: 128, 256>}, {transform_indices = @transform_3, window_bounds = array<i64: 16, 1>}]} {
    %c0_i32 = arith.constant 0 : i32
    %0 = arith.cmpi eq, %arg1, %c0_i32 : i32
    %1 = arith.extui %0 : i1 to i32
    %c0_i32_0 = arith.constant 0 : i32
    %2 = arith.cmpi ne, %1, %c0_i32_0 : i32
    scf.if %2 {
      %cst_28 = arith.constant 0xFF800000 : f32
      %49 = vector.broadcast %cst_28 : f32 to vector<16x1xf32>
      %c0_29 = arith.constant 0 : index
      %c0_30 = arith.constant 0 : index
      %50 = vector.load %arg6[%c0_29, %c0_30] : memref<16x1xf32, #tpu.memory_space<vmem>>, vector<16x1xf32>
      tpu.vector_store %arg6[%c0_29, %c0_30], %49 {strides = array<i32>} : memref<16x1xf32, #tpu.memory_space<vmem>>, vector<16x1xf32>,
      %cst_31 = arith.constant 0.000000e+00 : f32
      %51 = vector.broadcast %cst_31 : f32 to vector<16x1xf32>
      %c0_32 = arith.constant 0 : index
      %c0_33 = arith.constant 0 : index
      %52 = vector.load %arg7[%c0_32, %c0_33] : memref<16x1xf32, #tpu.memory_space<vmem>>, vector<16x1xf32>
      tpu.vector_store %arg7[%c0_32, %c0_33], %51 {strides = array<i32>} : memref<16x1xf32, #tpu.memory_space<vmem>>, vector<16x1xf32>,
      %cst_34 = arith.constant 0.000000e+00 : f32
      %53 = vector.broadcast %cst_34 : f32 to vector<16x1xf32>
      %c0_35 = arith.constant 0 : index
      %c0_36 = arith.constant 0 : index
      %54 = vector.load %arg8[%c0_35, %c0_36] : memref<16x1xf32, #tpu.memory_space<vmem>>, vector<16x1xf32>
      tpu.vector_store %arg8[%c0_35, %c0_36], %53 {strides = array<i32>} : memref<16x1xf32, #tpu.memory_space<vmem>>, vector<16x1xf32>,
    } else {
    }
    %c0 = arith.constant 0 : index
    %c0_1 = arith.constant 0 : index
    %3 = vector.load %arg3[%c0, %c0_1] : memref<16x128xbf16, #tpu.memory_space<vmem>>, vector<16x128xbf16>
    %c0_2 = arith.constant 0 : index
    %c0_3 = arith.constant 0 : index
    %4 = vector.load %arg4[%c0_2, %c0_3] : memref<128x256xbf16, #tpu.memory_space<vmem>>, vector<128x256xbf16>
    %cst = arith.constant dense<0.000000e+00> : vector<16x256xf32>
    %5 = tpu.matmul %3, %4, %cst {dimension_numbers = #tpu.dot_dimension_numbers<[1], [0], [0], [1], [0, 0, 1, 1], [], []>} : vector<16x128xbf16>, vector<128x256xbf16>, vector<16x256xf32> -> vector<16x256xf32>
    %c0_4 = arith.constant 0 : index
    %c0_5 = arith.constant 0 : index
    %6 = vector.load %arg2[%c0_4, %c0_5] : memref<16x1xi32, #tpu.memory_space<vmem>>, vector<16x1xi32>
    %7 = tpu.iota {dimensions = array<i32: 1>} : vector<1x256xi32>
    %c256_i32 = arith.constant 256 : i32
    %8 = arith.muli %arg1, %c256_i32 : i32
    %c200_i32 = arith.constant 200 : i32
    %9 = arith.subi %c200_i32, %8 : i32
    %10 = vector.broadcast %9 : i32 to vector<1x256xi32>
    %11 = arith.cmpi slt, %7, %10 : vector<1x256xi32>
    %cst_6 = arith.constant -1.000000e+30 : f32
    %12 = vector.shape_cast %11 : vector<1x256xi1> to vector<1x256xi1>
    %13 = vector.broadcast %12 : vector<1x256xi1> to vector<16x256xi1>
    %14 = vector.broadcast %cst_6 : f32 to vector<16x256xf32>
    %15 = arith.select %13, %5, %14 : vector<16x256xi1>, vector<16x256xf32>
    %c256_i32_7 = arith.constant 256 : i32
    %16 = arith.muli %arg1, %c256_i32_7 : i32
    %17 = vector.broadcast %16 : i32 to vector<16x1xi32>
    %18 = arith.subi %6, %17 : vector<16x1xi32>
    %19 = vector.broadcast %7 : vector<1x256xi32> to vector<16x256xi32>
    %20 = vector.broadcast %18 : vector<16x1xi32> to vector<16x256xi32>
    %21 = arith.cmpi eq, %19, %20 : vector<16x256xi32>
    %c0_8 = arith.constant 0 : index
    %c0_9 = arith.constant 0 : index
    %22 = vector.load %arg8[%c0_8, %c0_9] : memref<16x1xf32, #tpu.memory_space<vmem>>, vector<16x1xf32>
    %cst_10 = arith.constant 0.000000e+00 : f32
    %23 = vector.broadcast %cst_10 : f32 to vector<16x256xf32>
    %24 = arith.select %21, %15, %23 : vector<16x256xi1>, vector<16x256xf32>
    %cst_11 = arith.constant dense<0.000000e+00> : vector<16xf32>
    %25 = vector.multi_reduction <add>, %24, %cst_11 [1] : vector<16x256xf32> to vector<16xf32>
    %26 = vector.shape_cast %25 : vector<16xf32> to vector<16x1xf32>
    %27 = arith.addf %22, %26 : vector<16x1xf32>
    %c0_12 = arith.constant 0 : index
    %c0_13 = arith.constant 0 : index
    %28 = vector.load %arg8[%c0_12, %c0_13] : memref<16x1xf32, #tpu.memory_space<vmem>>, vector<16x1xf32>
    tpu.vector_store %arg8[%c0_12, %c0_13], %27 {strides = array<i32>} : memref<16x1xf32, #tpu.memory_space<vmem>>, vector<16x1xf32>,
    %c0_14 = arith.constant 0 : index
    %c0_15 = arith.constant 0 : index
    %29 = vector.load %arg6[%c0_14, %c0_15] : memref<16x1xf32, #tpu.memory_space<vmem>>, vector<16x1xf32>
    %cst_16 = arith.constant dense<0xFF800000> : vector<16xf32>
    %30 = vector.multi_reduction <maximumf>, %15, %cst_16 [1] : vector<16x256xf32> to vector<16xf32>
    %31 = vector.shape_cast %30 : vector<16xf32> to vector<16x1xf32>
    %32 = arith.maximumf %29, %31 : vector<16x1xf32>
    %c0_17 = arith.constant 0 : index
    %c0_18 = arith.constant 0 : index
    %33 = vector.load %arg7[%c0_17, %c0_18] : memref<16x1xf32, #tpu.memory_space<vmem>>, vector<16x1xf32>
    %c0_19 = arith.constant 0 : index
    %c0_20 = arith.constant 0 : index
    %34 = vector.load %arg6[%c0_19, %c0_20] : memref<16x1xf32, #tpu.memory_space<vmem>>, vector<16x1xf32>
    %35 = arith.subf %34, %32 : vector<16x1xf32>
    %36 = math.exp %35 : vector<16x1xf32>
    %37 = arith.mulf %33, %36 : vector<16x1xf32>
    %38 = vector.broadcast %32 : vector<16x1xf32> to vector<16x256xf32>
    %39 = arith.subf %15, %38 : vector<16x256xf32>
    %40 = math.exp %39 : vector<16x256xf32>
    %cst_21 = arith.constant dense<0.000000e+00> : vector<16xf32>
    %41 = vector.multi_reduction <add>, %40, %cst_21 [1] : vector<16x256xf32> to vector<16xf32>
    %42 = vector.shape_cast %41 : vector<16xf32> to vector<16x1xf32>
    %43 = arith.addf %37, %42 : vector<16x1xf32>
    %c0_22 = arith.constant 0 : index
    %c0_23 = arith.constant 0 : index
    %44 = vector.load %arg7[%c0_22, %c0_23] : memref<16x1xf32, #tpu.memory_space<vmem>>, vector<16x1xf32>
    tpu.vector_store %arg7[%c0_22, %c0_23], %43 {strides = array<i32>} : memref<16x1xf32, #tpu.memory_space<vmem>>, vector<16x1xf32>,
    %c0_24 = arith.constant 0 : index
    %c0_25 = arith.constant 0 : index
    %45 = vector.load %arg6[%c0_24, %c0_25] : memref<16x1xf32, #tpu.memory_space<vmem>>, vector<16x1xf32>
    tpu.vector_store %arg6[%c0_24, %c0_25], %32 {strides = array<i32>} : memref<16x1xf32, #tpu.memory_space<vmem>>, vector<16x1xf32>,
    %c0_i32_26 = arith.constant 0 : i32
    %46 = arith.cmpi eq, %arg1, %c0_i32_26 : i32
    %47 = arith.extui %46 : i1 to i32
    %c0_i32_27 = arith.constant 0 : i32
    %48 = arith.cmpi ne, %47, %c0_i32_27 : i32
    scf.if %48 {
      %c-100_i32 = arith.constant -100 : i32
      %49 = vector.broadcast %c-100_i32 : i32 to vector<16x1xi32>
      %50 = arith.cmpi ne, %6, %49 : vector<16x1xi32>
      %c0_28 = arith.constant 0 : index
      %c0_29 = arith.constant 0 : index
      %51 = vector.load %arg6[%c0_28, %c0_29] : memref<16x1xf32, #tpu.memory_space<vmem>>, vector<16x1xf32>
      %c0_30 = arith.constant 0 : index
      %c0_31 = arith.constant 0 : index
      %52 = vector.load %arg7[%c0_30, %c0_31] : memref<16x1xf32, #tpu.memory_space<vmem>>, vector<16x1xf32>
      %53 = math.log %52 : vector<16x1xf32>
      %54 = arith.addf %51, %53 : vector<16x1xf32>
      %c0_32 = arith.constant 0 : index
      %c0_33 = arith.constant 0 : index
      %55 = vector.load %arg8[%c0_32, %c0_33] : memref<16x1xf32, #tpu.memory_space<vmem>>, vector<16x1xf32>
      %56 = arith.subf %54, %55 : vector<16x1xf32>
      %cst_34 = arith.constant 0.000000e+00 : f32
      %57 = vector.broadcast %cst_34 : f32 to vector<16x1xf32>
      %58 = arith.select %50, %56, %57 : vector<16x1xi1>, vector<16x1xf32>
      %c0_35 = arith.constant 0 : index
      %c0_36 = arith.constant 0 : index
      %59 = vector.load %arg5[%c0_35, %c0_36] : memref<16x1xf32, #tpu.memory_space<vmem>>, vector<16x1xf32>
      tpu.vector_store %arg5[%c0_35, %c0_36], %58 {strides = array<i32>} : memref<16x1xf32, #tpu.memory_space<vmem>>, vector<16x1xf32>,
    } else {
    }
    return
  }
  func.func @transform_0(%arg0: i32, %arg1: i32) -> (i32, i32) {
    %c0_i32 = arith.constant 0 : i32
    %c0_i32_0 = arith.constant 0 : i32
    return %arg0, %c0_i32 : i32, i32
  }
  func.func @transform_1(%arg0: i32, %arg1: i32) -> (i32, i32) {
    %c0_i32 = arith.constant 0 : i32
    %c0_i32_0 = arith.constant 0 : i32
    return %arg0, %c0_i32 : i32, i32
  }
  func.func @transform_2(%arg0: i32, %arg1: i32) -> (i32, i32) {
    %c0_i32 = arith.constant 0 : i32
    %c0_i32_0 = arith.constant 0 : i32
    return %c0_i32, %arg1 : i32, i32
  }
  func.func @transform_3(%arg0: i32, %arg1: i32) -> (i32, i32) {
    %c0_i32 = arith.constant 0 : i32
    %c0_i32_0 = arith.constant 0 : i32
    return %arg0, %c0_i32 : i32, i32
  }
}

</mosaic_0001>

<llo_original>
// kernel: _total_loss.2
$region0: #{_total_loss.2}
  #allocation0 [shape = 'u32[]', space=smem, size = 0x4, offset = 0x4, fixed_abs, tag = 'smem constant byte address 0x4 - core index']
  #allocation1 [shape = 'u32[144,128]{1,0:T(1,128)}', space=vmem, size = 0x12000, scoped, tag = 'internal scratch']
  #allocation2 [shape = 'f32[1,1]{1,0:T(1,128)S(1)}', space=vmem, size = 0x200, scoped, tag = 'scoped memory for _total_loss.2']
  %s0 = inlined_call_operand.vmem [shape: bf16[8,8,128], index: 0, kind: input, shape index: {}]
  %s1 = inlined_call_operand.vmem [shape: bf16[8,10,128], index: 1, kind: input, shape index: {}]
  %s2 = inlined_call_operand.vmem [shape: f32[8,1], index: 2, kind: input, shape index: {}]
  %s3 = inlined_call_operand.vmem [shape: f32[8,1], index: 3, kind: input, shape index: {}]
  %s4 = inlined_call_operand.vmem [shape: f32[1,128], index: 4, kind: input, shape index: {}]
  %s5 = inlined_call_operand.<no memory space> [shape: f32[1,1], index: 5, kind: input, shape index: {}]
  %s6 = inlined_call_operand.hbm [shape: f32[8,1], index: 6, kind: output, shape index: {0}]
  %s7 = inlined_call_operand.hbm [shape: f32[8,1], index: 7, kind: output, shape index: {1}]
  %s8 = inlined_call_operand.vmem [shape: f32[8,1], index: 8, kind: output, shape index: {2}]
  %s9 = inlined_call_operand.vmem [shape: f32[8,1], index: 9, kind: output, shape index: {3}]
  %10 = xla_tuple %s6, %s7, %s8, %s9
  %s11 = sld [smem:[#allocation0]]
  $region58: #{_total_loss.2} parent=0
    _
  %s13 = ssub.s32 1, %s11
  %s14 = scalar_select 0, %s13, %s11
  %v15 = vstv %s5
  %16 = vst [vmem:[#allocation2] sm:$0x1] %v15
  $region1: #{_total_loss.2} parent=0
    #allocation3 [shape = 'u8[4096]{0}', space=vmem, size = 0x1000, scoped, tag = 'output window, operand 0, single buffered']
    #allocation4 [shape = 's32[1]{0}', space=sflag, size = 0x4, scoped, tag = 'scoped memory for _total_loss.2']
    #allocation5 [shape = 'u8[4096]{0}', space=vmem, size = 0x1000, scoped, tag = 'output window, operand 1, single buffered']
    #allocation6 [shape = 's32[1]{0}', space=sflag, size = 0x4, scoped, tag = 'scoped memory for _total_loss.2']
    %17 = vsyncpa [#allocation4], 0
    %18 = vsyncpa [#allocation6], 0
    // Predicated region
    $region2: #{_total_loss.2} parent=1 // pred_check
      _
    $region3: #{_total_loss.2} parent=1 // pred_check_branch
      %20 = sbr.rel (0) target = $region5
    $region4: #{_total_loss.2} parent=1 // pred_region
      _
    $region5: #{_total_loss.2} parent=1 // pred_fallthru
      _
    // Predicated region
    $region6: #{_total_loss.2} parent=1 // pred_check
      _
    $region7: #{_total_loss.2} parent=1 // pred_check_branch
      %22 = sbr.rel (0) target = $region9
    $region8: #{_total_loss.2} parent=1 // pred_region
      _
    $region9: #{_total_loss.2} parent=1 // pred_fallthru
      _
    // Predicated region
    $region10: #{_total_loss.2} parent=1 // pred_check
      _
    $region11: #{_total_loss.2} parent=1 // pred_check_branch
      %24 = sbr.rel (0) target = $region13
    $region12: #{_total_loss.2} parent=1 // pred_region
      _
    $region13: #{_total_loss.2} parent=1 // pred_fallthru
      _
    // Predicated region
    $region14: #{_total_loss.2} parent=1 // pred_check
      _
    $region15: #{_total_loss.2} parent=1 // pred_check_branch
      %26 = sbr.rel (0) target = $region17
    $region16: #{_total_loss.2} parent=1 // pred_region
      _
    $region17: #{_total_loss.2} parent=1 // pred_fallthru
      _
    // Predicated region
    $region18: #{_total_loss.2} parent=1 // pred_check
      _
    $region19: #{_total_loss.2} parent=1 // pred_check_branch
      %28 = sbr.rel (0) target = $region21
    $region20: #{_total_loss.2} parent=1 // pred_region
      _
    $region21: #{_total_loss.2} parent=1 // pred_fallthru
      _
    // Predicated region
    $region22: #{_total_loss.2} parent=1 // pred_check
      _
    $region23: #{_total_loss.2} parent=1 // pred_check_branch
      %30 = sbr.rel (0) target = $region25
    $region24: #{_total_loss.2} parent=1 // pred_region
      _
    $region25: #{_total_loss.2} parent=1 // pred_fallthru
      _
    %v31 = vld [vmem:[%s4] sm:$0x1]
    %v32 = vld [vmem:[#allocation2] sm:$0x1]
    %v33 = vld [vmem:[%s0] sm:$0xf]
    %v34 = vld [vmem:[%s0 + $0x4] sm:$0xf]
    %v35 = vld [vmem:[%s0 + $0x8] sm:$0xf]
    %v36 = vld [vmem:[%s0 + $0xc] sm:$0xf]
    %v37 = vld [vmem:[%s0 + $0x10] sm:$0xf]
    %v38 = vld [vmem:[%s0 + $0x14] sm:$0xf]
    %v39 = vld [vmem:[%s0 + $0x18] sm:$0xf]
    %v40 = vld [vmem:[%s0 + $0x1c] sm:$0xf]
    %v41 = vunpack.c.l.bf16 %v33
    %v42 = vunpack.c.l.bf16 %v34
    %v43 = vunpack.c.l.bf16 %v35
    %v44 = vunpack.c.l.bf16 %v36
    %v45 = vunpack.c.l.bf16 %v37
    %v46 = vunpack.c.l.bf16 %v38
    %v47 = vunpack.c.l.bf16 %v39
    %v48 = vunpack.c.l.bf16 %v40
    %v49 = vrot.slane %v41, 4
    %v50 = vadd.f32 %v41, %v49
    %v51 = vrot.slane %v50, 2
    %v52 = vadd.f32 %v50, %v51
    %v53 = vrot.slane %v52, 1
    %v54 = vadd.f32 %v52, %v53
    %v55 = vrot.slane %v42, 4
    %v56 = vadd.f32 %v42, %v55
    %v57 = vrot.slane %v56, 2
    %v58 = vadd.f32 %v56, %v57
    %v59 = vrot.slane %v58, 1
    %v60 = vadd.f32 %v58, %v59
    %v61 = vrot.slane %v43, 4
    %v62 = vadd.f32 %v43, %v61
    %v63 = vrot.slane %v62, 2
    %v64 = vadd.f32 %v62, %v63
    %v65 = vrot.slane %v64, 1
    %v66 = vadd.f32 %v64, %v65
    %v67 = vrot.slane %v44, 4
    %v68 = vadd.f32 %v44, %v67
    %v69 = vrot.slane %v68, 2
    %v70 = vadd.f32 %v68, %v69
    %v71 = vrot.slane %v70, 1
    %v72 = vadd.f32 %v70, %v71
    %v73 = vrot.slane %v45, 4
    %v74 = vadd.f32 %v45, %v73
    %v75 = vrot.slane %v74, 2
    %v76 = vadd.f32 %v74, %v75
    %v77 = vrot.slane %v76, 1
    %v78 = vadd.f32 %v76, %v77
    %v79 = vrot.slane %v46, 4
    %v80 = vadd.f32 %v46, %v79
    %v81 = vrot.slane %v80, 2
    %v82 = vadd.f32 %v80, %v81
    %v83 = vrot.slane %v82, 1
    %v84 = vadd.f32 %v82, %v83
    %v85 = vrot.slane %v47, 4
    %v86 = vadd.f32 %v47, %v85
    %v87 = vrot.slane %v86, 2
    %v88 = vadd.f32 %v86, %v87
    %v89 = vrot.slane %v88, 1
    %v90 = vadd.f32 %v88, %v89
    %v91 = vrot.slane %v48, 4
    %v92 = vadd.f32 %v48, %v91
    %v93 = vrot.slane %v92, 2
    %v94 = vadd.f32 %v92, %v93
    %v95 = vrot.slane %v94, 1
    %v96 = vadd.f32 %v94, %v95
    %v97 = vmul.f32 %v54, 0.125
    %v98 = vmul.f32 %v60, 0.125
    %v99 = vmul.f32 %v66, 0.125
    %v100 = vmul.f32 %v72, 0.125
    %v101 = vmul.f32 %v78, 0.125
    %v102 = vmul.f32 %v84, 0.125
    %v103 = vmul.f32 %v90, 0.125
    %v104 = vmul.f32 %v96, 0.125
    %v106 = vlaneseq
    %v107 = vshrl.u32 %v106, 7
    %v108 = vsub.s32 0, %v107
    %v109 = vrot.slane %v31, %v108
    %v111 = vmul.f32 %v97, %v109
    %v112 = vmul.f32 %v98, %v109
    %v113 = vmul.f32 %v99, %v109
    %v114 = vmul.f32 %v100, %v109
    %v115 = vmul.f32 %v101, %v109
    %v116 = vmul.f32 %v102, %v109
    %v117 = vmul.f32 %v103, %v109
    %v118 = vmul.f32 %v104, %v109
    %v127 = vrot.slane %v112, 7
    %vm128 = vcmask 1041409
    %v129 = vsel %vm128, %v127, %v111
    %v130 = vrot.slane %v113, 6
    %vm131 = vcmask 1042434
    %v132 = vsel %vm131, %v130, %v129
    %v133 = vrot.slane %v114, 5
    %vm134 = vcmask 1043459
    %v135 = vsel %vm134, %v133, %v132
    %v136 = vrot.slane %v115, 4
    %vm137 = vcmask 1044484
    %v138 = vsel %vm137, %v136, %v135
    %v139 = vrot.slane %v116, 3
    %vm140 = vcmask 1045509
    %v141 = vsel %vm140, %v139, %v138
    %v142 = vrot.slane %v117, 2
    %vm143 = vcmask 1046534
    %v144 = vsel %vm143, %v142, %v141
    %v145 = vrot.slane %v118, 1
    %vm146 = vcmask 1047559
    %v147 = vsel %vm146, %v145, %v144
    %149 = vadd.xlane.f32.xlu0 %v147
    %v150 = vpop.xlane.xlu0 %149
    %v152 = vlaneseq
    %v153 = vshrl.u32 %v152, 7
    %v154 = vsub.s32 0, %v153
    %v155 = vrot.slane %v32, %v154
    %v157 = vadd.f32 %v150, %v155
    %v158 = vld [vmem:[%s2] sm:$0xff]
    %v159 = vmax.f32 %v157, 0.0
    %v160 = vmul.f32 %v157, %v158
    %v161 = vsub.f32 %v159, %v160
    %v162 = vand.u32 2147483647, %v157
    %v163 = vsub.f32 0.0, %v162
    %v164 = vmul.f32 %v163, 1.442695
    %v165 = vpow.pop %v164
    %v166 = vadd.f32 %v165, 1.0
    %v167 = vlog2.pop %v166
    %v168 = vmul.f32 %v167, 0.6931472
    %v169 = vmul.f32 -0.5, %v165
    %v170 = vadd.f32 %v169, 1.0
    %v171 = vmul.f32 %v170, %v165
    %v172 = vand.u32 2147483647, %v165
    %vm173 = vcmp.lt.f32.partialorder %v172, 0.0004427343
    %v174 = vsel %vm173, %v171, %v168
    %v175 = vadd.f32 %v161, %v174
    %vm176 = vcmask 7168
    %177 = vst.msk [vmem:[#allocation3] sm:$0xff] %vm176, %v157
    %178 = vst.msk [vmem:[%s8] sm:$0xff] %vm176, %v175
    %v179 = vld [vmem:[%s1] sm:$0xf]
    %v180 = vld [vmem:[%s1 + $0x4] sm:$0x1]
    %v181 = vld [vmem:[%s1 + $0x8] sm:$0xf]
    %v182 = vld [vmem:[%s1 + $0xc] sm:$0x1]
    %v183 = vld [vmem:[%s1 + $0x10] sm:$0xf]
    %v184 = vld [vmem:[%s1 + $0x14] sm:$0x1]
    %v185 = vld [vmem:[%s1 + $0x18] sm:$0xf]
    %v186 = vld [vmem:[%s1 + $0x1c] sm:$0x1]
    %v187 = vld [vmem:[%s1 + $0x20] sm:$0xf]
    %v188 = vld [vmem:[%s1 + $0x24] sm:$0x1]
    %v189 = vld [vmem:[%s1 + $0x28] sm:$0xf]
    %v190 = vld [vmem:[%s1 + $0x2c] sm:$0x1]
    %v191 = vld [vmem:[%s1 + $0x30] sm:$0xf]
    %v192 = vld [vmem:[%s1 + $0x34] sm:$0x1]
    %v193 = vld [vmem:[%s1 + $0x38] sm:$0xf]
    %v194 = vld [vmem:[%s1 + $0x3c] sm:$0x1]
    %v195 = vunpack.c.l.bf16 %v179
    %v196 = vunpack.c.l.bf16 %v180
    %v197 = vunpack.c.l.bf16 %v181
    %v198 = vunpack.c.l.bf16 %v182
    %v199 = vunpack.c.l.bf16 %v183
    %v200 = vunpack.c.l.bf16 %v184
    %v201 = vunpack.c.l.bf16 %v185
    %v202 = vunpack.c.l.bf16 %v186
    %v203 = vunpack.c.l.bf16 %v187
    %v204 = vunpack.c.l.bf16 %v188
    %v205 = vunpack.c.l.bf16 %v189
    %v206 = vunpack.c.l.bf16 %v190
    %v207 = vunpack.c.l.bf16 %v191
    %v208 = vunpack.c.l.bf16 %v192
    %v209 = vunpack.c.l.bf16 %v193
    %v210 = vunpack.c.l.bf16 %v194
    %vm211 = vcmask 1041408
    %v212 = vsel %vm211, %v196, 0.0
    %v213 = vadd.f32 %v195, %v212
    %v214 = vrot.slane %v213, 4
    %v215 = vadd.f32 %v213, %v214
    %v216 = vrot.slane %v215, 2
    %v217 = vadd.f32 %v215, %v216
    %v218 = vrot.slane %v217, 1
    %v219 = vadd.f32 %v217, %v218
    %v220 = vsel %vm211, %v198, 0.0
    %v221 = vadd.f32 %v197, %v220
    %v222 = vrot.slane %v221, 4
    %v223 = vadd.f32 %v221, %v222
    %v224 = vrot.slane %v223, 2
    %v225 = vadd.f32 %v223, %v224
    %v226 = vrot.slane %v225, 1
    %v227 = vadd.f32 %v225, %v226
    %v228 = vsel %vm211, %v200, 0.0
    %v229 = vadd.f32 %v199, %v228
    %v230 = vrot.slane %v229, 4
    %v231 = vadd.f32 %v229, %v230
    %v232 = vrot.slane %v231, 2
    %v233 = vadd.f32 %v231, %v232
    %v234 = vrot.slane %v233, 1
    %v235 = vadd.f32 %v233, %v234
    %v236 = vsel %vm211, %v202, 0.0
    %v237 = vadd.f32 %v201, %v236
    %v238 = vrot.slane %v237, 4
    %v239 = vadd.f32 %v237, %v238
    %v240 = vrot.slane %v239, 2
    %v241 = vadd.f32 %v239, %v240
    %v242 = vrot.slane %v241, 1
    %v243 = vadd.f32 %v241, %v242
    %v244 = vsel %vm211, %v204, 0.0
    %v245 = vadd.f32 %v203, %v244
    %v246 = vrot.slane %v245, 4
    %v247 = vadd.f32 %v245, %v246
    %v248 = vrot.slane %v247, 2
    %v249 = vadd.f32 %v247, %v248
    %v250 = vrot.slane %v249, 1
    %v251 = vadd.f32 %v249, %v250
    %v252 = vsel %vm211, %v206, 0.0
    %v253 = vadd.f32 %v205, %v252
    %v254 = vrot.slane %v253, 4
    %v255 = vadd.f32 %v253, %v254
    %v256 = vrot.slane %v255, 2
    %v257 = vadd.f32 %v255, %v256
    %v258 = vrot.slane %v257, 1
    %v259 = vadd.f32 %v257, %v258
    %v260 = vsel %vm211, %v208, 0.0
    %v261 = vadd.f32 %v207, %v260
    %v262 = vrot.slane %v261, 4
    %v263 = vadd.f32 %v261, %v262
    %v264 = vrot.slane %v263, 2
    %v265 = vadd.f32 %v263, %v264
    %v266 = vrot.slane %v265, 1
    %v267 = vadd.f32 %v265, %v266
    %v268 = vsel %vm211, %v210, 0.0
    %v269 = vadd.f32 %v209, %v268
    %v270 = vrot.slane %v269, 4
    %v271 = vadd.f32 %v269, %v270
    %v272 = vrot.slane %v271, 2
    %v273 = vadd.f32 %v271, %v272
    %v274 = vrot.slane %v273, 1
    %v275 = vadd.f32 %v273, %v274
    %v276 = vmul.f32 %v219, 0.1
    %v277 = vmul.f32 %v227, 0.1
    %v278 = vmul.f32 %v235, 0.1
    %v279 = vmul.f32 %v243, 0.1
    %v280 = vmul.f32 %v251, 0.1
    %v281 = vmul.f32 %v259, 0.1
    %v282 = vmul.f32 %v267, 0.1
    %v283 = vmul.f32 %v275, 0.1
    %v284 = vmul.f32 %v276, %v109
    %v285 = vmul.f32 %v277, %v109
    %v286 = vmul.f32 %v278, %v109
    %v287 = vmul.f32 %v279, %v109
    %v288 = vmul.f32 %v280, %v109
    %v289 = vmul.f32 %v281, %v109
    %v290 = vmul.f32 %v282, %v109
    %v291 = vmul.f32 %v283, %v109
    %v300 = vrot.slane %v285, 7
    %v301 = vsel %vm128, %v300, %v284
    %v302 = vrot.slane %v286, 6
    %v303 = vsel %vm131, %v302, %v301
    %v304 = vrot.slane %v287, 5
    %v305 = vsel %vm134, %v304, %v303
    %v306 = vrot.slane %v288, 4
    %v307 = vsel %vm137, %v306, %v305
    %v308 = vrot.slane %v289, 3
    %v309 = vsel %vm140, %v308, %v307
    %v310 = vrot.slane %v290, 2
    %v311 = vsel %vm143, %v310, %v309
    %v312 = vrot.slane %v291, 1
    %v313 = vsel %vm146, %v312, %v311
    %315 = vadd.xlane.f32.xlu0 %v313
    %v316 = vpop.xlane.xlu0 %315
    %v317 = vadd.f32 %v316, %v155
    %v318 = vld [vmem:[%s3] sm:$0xff]
    %v319 = vmax.f32 %v317, 0.0
    %v320 = vmul.f32 %v317, %v318
    %v321 = vsub.f32 %v319, %v320
    %v322 = vand.u32 2147483647, %v317
    %v323 = vsub.f32 0.0, %v322
    %v324 = vmul.f32 %v323, 1.442695
    %v325 = vpow.pop %v324
    %v326 = vadd.f32 %v325, 1.0
    %v327 = vlog2.pop %v326
    %v328 = vmul.f32 %v327, 0.6931472
    %v329 = vmul.f32 -0.5, %v325
    %v330 = vadd.f32 %v329, 1.0
    %v331 = vmul.f32 %v330, %v325
    %v332 = vand.u32 2147483647, %v325
    %vm333 = vcmp.lt.f32.partialorder %v332, 0.0004427343
    %v334 = vsel %vm333, %v331, %v328
    %v335 = vadd.f32 %v321, %v334
    %336 = vst.msk [vmem:[#allocation5] sm:$0xff] %vm176, %v317
    %337 = vst.msk [vmem:[%s9] sm:$0xff] %vm176, %v335
    // Predicated region
    $region26: #{_total_loss.2} parent=1 // pred_check
      _
    $region27: #{_total_loss.2} parent=1 // pred_check_branch
      %339 = sbr.rel (0) target = $region29
    $region28: #{_total_loss.2} parent=1 // pred_region
      %s341 = ssub.s32 128, 128
      %342 = vsyncadd [#allocation4], %s341
      %s344 = sshll.u32 [#allocation3], 4
      %s345 = int_to_ptr.vmem [resolvable:$true] %s344
      %347 = dma.vmem_to_hbm [thread:$0]  %s345, 128, %s6, [#allocation4]
    $region29: #{_total_loss.2} parent=1 // pred_fallthru
      _
    // Predicated region
    $region30: #{_total_loss.2} parent=1 // pred_check
      _
    $region31: #{_total_loss.2} parent=1 // pred_check_branch
      %349 = sbr.rel (0) target = $region33
    $region32: #{_total_loss.2} parent=1 // pred_region
      %s351 = ssub.s32 128, 128
      %352 = vsyncadd [#allocation6], %s351
      %s354 = sshll.u32 [#allocation5], 4
      %s355 = int_to_ptr.vmem [resolvable:$true] %s354
      %357 = dma.vmem_to_hbm [thread:$0]  %s355, 128, %s7, [#allocation6]
    $region33: #{_total_loss.2} parent=1 // pred_fallthru
      _
    // Predicated region
    $region34: #{_total_loss.2} parent=1 // pred_check
      _
    $region35: #{_total_loss.2} parent=1 // pred_check_branch
      %359 = sbr.rel (0) target = $region37
    $region36: #{_total_loss.2} parent=1 // pred_region
      _
    $region37: #{_total_loss.2} parent=1 // pred_fallthru
      _
    // Predicated region
    $region38: #{_total_loss.2} parent=1 // pred_check
      _
    $region39: #{_total_loss.2} parent=1 // pred_check_branch
      %361 = sbr.rel (0) target = $region41
    $region40: #{_total_loss.2} parent=1 // pred_region
      _
    $region41: #{_total_loss.2} parent=1 // pred_fallthru
      _
    // Predicated region
    $region42: #{_total_loss.2} parent=1 // pred_check
      _
    $region43: #{_total_loss.2} parent=1 // pred_check_branch
      %363 = sbr.rel (0) target = $region45
    $region44: #{_total_loss.2} parent=1 // pred_region
      %364 = dma.done [#allocation4], 128
    $region45: #{_total_loss.2} parent=1 // pred_fallthru
      _
    // Predicated region
    $region46: #{_total_loss.2} parent=1 // pred_check
      _
    $region47: #{_total_loss.2} parent=1 // pred_check_branch
      %366 = sbr.rel (0) target = $region49
    $region48: #{_total_loss.2} parent=1 // pred_region
      %367 = dma.done [#allocation6], 128
    $region49: #{_total_loss.2} parent=1 // pred_fallthru
      _
    // Predicated region
    $region50: #{_total_loss.2} parent=1 // pred_check
      _
    $region51: #{_total_loss.2} parent=1 // pred_check_branch
      %369 = sbr.rel (0) target = $region53
    $region52: #{_total_loss.2} parent=1 // pred_region
      _
    $region53: #{_total_loss.2} parent=1 // pred_fallthru
      _
    // Predicated region
    $region54: #{_total_loss.2} parent=1 // pred_check
      _
    $region55: #{_total_loss.2} parent=1 // pred_check_branch
      %371 = sbr.rel (0) target = $region57
    $region56: #{_total_loss.2} parent=1 // pred_region
      _
    $region57: #{_total_loss.2} parent=1 // pred_fallthru
      _
    %372 = vsyncpa [#allocation4], 1
    %373 = vsyncpa [#allocation6], 1

// kernel: _total_loss.3
$region0: #{_total_loss.3}
  #allocation0 [shape = 'u32[]', space=smem, size = 0x4, offset = 0x4, fixed_abs, tag = 'smem constant byte address 0x4 - core index']
  #allocation1 [shape = 'u32[144,128]{1,0:T(1,128)}', space=vmem, size = 0x12000, scoped, tag = 'internal scratch']
  #allocation2 [shape = 'f32[16,1]{1,0:T(8,128)}', space=vmem, size = 0x2000, scoped, tag = 'scratch operand']
  #allocation3 [shape = 'f32[16,1]{1,0:T(8,128)}', space=vmem, size = 0x2000, scoped, tag = 'scratch operand']
  #allocation4 [shape = 'f32[16,1]{1,0:T(8,128)}', space=vmem, size = 0x2000, scoped, tag = 'scratch operand']
  %s0 = inlined_call_operand.vmem [shape: s32[16,1], index: 0, kind: input, shape index: {}]
  %s1 = inlined_call_operand.vmem [shape: bf16[16,128], index: 1, kind: input, shape index: {}]
  %s2 = inlined_call_operand.vmem [shape: bf16[128,256], index: 2, kind: input, shape index: {}]
  %s3 = inlined_call_operand.vmem [shape: f32[16,1], index: 3, kind: output, shape index: {}]
  %s4 = sld [smem:[#allocation0]]
  $region30: #{_total_loss.3} parent=0
    _
  %s6 = ssub.s32 1, %s4
  %s7 = scalar_select 0, %s6, %s4
  // Predicated region
  $region2: #{_total_loss.3} parent=0 // pred_check
    _
  $region3: #{_total_loss.3} parent=0 // pred_check_branch
    %9 = sbr.rel (0) target = $region5
  $region4: #{_total_loss.3} parent=0 // pred_region
    _
  $region5: #{_total_loss.3} parent=0 // pred_fallthru
    _
  // Predicated region
  $region6: #{_total_loss.3} parent=0 // pred_check
    _
  $region7: #{_total_loss.3} parent=0 // pred_check_branch
    %11 = sbr.rel (0) target = $region9
  $region8: #{_total_loss.3} parent=0 // pred_region
    _
  $region9: #{_total_loss.3} parent=0 // pred_fallthru
    _
  // Predicated region
  $region10: #{_total_loss.3} parent=0 // pred_check
    _
  $region11: #{_total_loss.3} parent=0 // pred_check_branch
    %13 = sbr.rel (0) target = $region13
  $region12: #{_total_loss.3} parent=0 // pred_region
    _
  $region13: #{_total_loss.3} parent=0 // pred_fallthru
    _
  %p15 = scmp.eq.s32.totalorder 0, 0
  // Predicated region
  $region14: #{_total_loss.3} parent=0 // pred_check
    %p16 = pneg %p15
  $region15: #{_total_loss.3} parent=0 // pred_check_branch
    %18 = sbr.rel (%p16) target = $region17
  $region16: #{_total_loss.3} parent=0 // pred_region
    %vm19 = vcmask 7168
    %20 = vst.msk [vmem:[#allocation2] sm:$0xff] %vm19, -inf
    %21 = vst.msk [vmem:[#allocation2 + $0x8] sm:$0xff] %vm19, -inf
    %22 = vst.msk [vmem:[#allocation3] sm:$0xff] %vm19, 0.0
    %23 = vst.msk [vmem:[#allocation3 + $0x8] sm:$0xff] %vm19, 0.0
    %24 = vst.msk [vmem:[#allocation4] sm:$0xff] %vm19, 0.0
    %25 = vst.msk [vmem:[#allocation4 + $0x8] sm:$0xff] %vm19, 0.0
  $region17: #{_total_loss.3} parent=0 // pred_fallthru
    _
  %v26 = vld [vmem:[%s1] sm:$0xf]
  %v27 = vld [vmem:[%s1 + $0x4] sm:$0xf]
  %v28 = vld [vmem:[%s2] sm:$0xff]
  %v29 = vld [vmem:[%s2 + $0x8] sm:$0xff]
  %v30 = vld [vmem:[%s2 + $0x10] sm:$0xff]
  %v31 = vld [vmem:[%s2 + $0x18] sm:$0xff]
  %v32 = vld [vmem:[%s2 + $0x20] sm:$0xff]
  %v33 = vld [vmem:[%s2 + $0x28] sm:$0xff]
  %v34 = vld [vmem:[%s2 + $0x30] sm:$0xff]
  %v35 = vld [vmem:[%s2 + $0x38] sm:$0xff]
  %v36 = vld [vmem:[%s2 + $0x40] sm:$0xff]
  %v37 = vld [vmem:[%s2 + $0x48] sm:$0xff]
  %v38 = vld [vmem:[%s2 + $0x50] sm:$0xff]
  %v39 = vld [vmem:[%s2 + $0x58] sm:$0xff]
  %v40 = vld [vmem:[%s2 + $0x60] sm:$0xff]
  %v41 = vld [vmem:[%s2 + $0x68] sm:$0xff]
  %v42 = vld [vmem:[%s2 + $0x70] sm:$0xff]
  %v43 = vld [vmem:[%s2 + $0x78] sm:$0xff]
  %v46 = vunpack.c.l.b16 %v26
  %v47 = vunpack.c.l.b16 %v27
  %v48 = vpack.c.b16 %v47, %v46
  %v66 = vunpack.c.l.b16 %v28
  %v67 = vunpack.c.h.b16 %v28
  %v68 = vunpack.c.l.b16 %v29
  %v69 = vunpack.c.h.b16 %v29
  %v70 = vunpack.c.l.b16 %v30
  %v71 = vunpack.c.h.b16 %v30
  %v72 = vunpack.c.l.b16 %v31
  %v73 = vunpack.c.h.b16 %v31
  %v74 = vunpack.c.l.b16 %v32
  %v75 = vunpack.c.h.b16 %v32
  %v76 = vunpack.c.l.b16 %v33
  %v77 = vunpack.c.h.b16 %v33
  %v78 = vunpack.c.l.b16 %v34
  %v79 = vunpack.c.h.b16 %v34
  %v80 = vunpack.c.l.b16 %v35
  %v81 = vunpack.c.h.b16 %v35
  %v82 = vunpack.c.l.b16 %v36
  %v83 = vunpack.c.h.b16 %v36
  %v84 = vunpack.c.l.b16 %v37
  %v85 = vunpack.c.h.b16 %v37
  %v86 = vunpack.c.l.b16 %v38
  %v87 = vunpack.c.h.b16 %v38
  %v88 = vunpack.c.l.b16 %v39
  %v89 = vunpack.c.h.b16 %v39
  %v90 = vunpack.c.l.b16 %v40
  %v91 = vunpack.c.h.b16 %v40
  %v92 = vunpack.c.l.b16 %v41
  %v93 = vunpack.c.h.b16 %v41
  %v94 = vunpack.c.l.b16 %v42
  %v95 = vunpack.c.h.b16 %v42
  %v96 = vunpack.c.l.b16 %v43
  %v97 = vunpack.c.h.b16 %v43
  %v98 = vpack.c.b16 %v68, %v66
  %v99 = vpack.c.b16 %v69, %v67
  %v100 = vpack.c.b16 %v72, %v70
  %v101 = vpack.c.b16 %v73, %v71
  %v102 = vpack.c.b16 %v76, %v74
  %v103 = vpack.c.b16 %v77, %v75
  %v104 = vpack.c.b16 %v80, %v78
  %v105 = vpack.c.b16 %v81, %v79
  %v106 = vpack.c.b16 %v84, %v82
  %v107 = vpack.c.b16 %v85, %v83
  %v108 = vpack.c.b16 %v88, %v86
  %v109 = vpack.c.b16 %v89, %v87
  %v110 = vpack.c.b16 %v92, %v90
  %v111 = vpack.c.b16 %v93, %v91
  %v112 = vpack.c.b16 %v96, %v94
  %v113 = vpack.c.b16 %v97, %v95
  %130 = vmatprep.subr.bf16.mxu0 %v99
  %131 = vmatpush1.bf16.msra.mxu0 %v98
  %132 = vmatprep.subr.bf16.mxu0 %v101
  %133 = vmatpush1.bf16.msra.mxu0 %v100
  %134 = vmatprep.subr.bf16.mxu0 %v103
  %135 = vmatpush1.bf16.msra.mxu0 %v102
  %136 = vmatprep.subr.bf16.mxu0 %v105
  %137 = vmatpush1.bf16.msra.mxu0 %v104
  %138 = vmatprep.subr.bf16.mxu0 %v107
  %139 = vmatpush1.bf16.msra.mxu0 %v106
  %140 = vmatprep.subr.bf16.mxu0 %v109
  %141 = vmatpush1.bf16.msra.mxu0 %v108
  %142 = vmatprep.subr.bf16.mxu0 %v111
  %143 = vmatpush1.bf16.msra.mxu0 %v110
  %144 = vmatprep.subr.bf16.mxu0 %v113
  %145 = vmatpush1.bf16.msra.mxu0 %v112
  %146 = vmatprep.subr.bf16.mxu0 0
  %147 = vmatpush1.bf16.msra.mxu0 0
  %148 = vmatprep.subr.bf16.mxu0 0
  %149 = vmatpush1.bf16.msra.mxu0 0
  %150 = vmatprep.subr.bf16.mxu0 0
  %151 = vmatpush1.bf16.msra.mxu0 0
  %152 = vmatprep.subr.bf16.mxu0 0
  %153 = vmatpush1.bf16.msra.mxu0 0
  %154 = vmatprep.subr.bf16.mxu0 0
  %155 = vmatpush1.bf16.msra.mxu0 0
  %156 = vmatprep.subr.bf16.mxu0 0
  %157 = vmatpush1.bf16.msra.mxu0 0
  %158 = vmatprep.subr.bf16.mxu0 0
  %159 = vmatpush1.bf16.msra.mxu0 0
  %160 = vmatprep.subr.bf16.mxu0 0
  %161 = vmatpush1.bf16.msra.mxu0 0
  %162 = vmatprep.mubr.bf16.mxu0 0
  %163 = vmatmul.mubr.bf16.gmra.mrb[0].mxu0 %v48
  %v164 = vpop.f32.mrb[0].mxu0
  %v165 = vadd.f32 0.0, %v164
  %v166 = vpop.f32.mrb[0].mxu0
  %v167 = vadd.f32 0.0, %v166
  %v168 = vpop.f32.mrb[0].mxu0
  %v169 = vadd.f32 0.0, %v168
  %v170 = vpop.f32.mrb[0].mxu0
  %v171 = vadd.f32 0.0, %v170
  %172 = vdwg.mxu0
  %v173 = vld [vmem:[%s0] sm:$0xff]
  %v174 = vld [vmem:[%s0 + $0x8] sm:$0xff]
  %v175 = vlaneseq
  %v176 = vand.u32 %v175, 127
  %v177 = vadd.s32 %v176, 128
  %s178 = smul.u32 0, 256
  %s179 = ssub.s32 200, %s178
  %v180 = vstv %s179
  %vm181 = vcmp.lt.s32.totalorder %v176, %v180
  %vm182 = vcmp.lt.s32.totalorder %v177, %v180
  %v183 = vsel %vm181, 1, 0
  %v184 = vsel %vm182, 1, 0
  %vm185 = vcmp.eq.s32.totalorder %v183, 1
  %vm186 = vcmp.eq.s32.totalorder %v184, 1
  %v187 = vsel %vm185, %v165, -1e+30
  %v188 = vsel %vm186, %v167, -1e+30
  %v189 = vsel %vm185, %v169, -1e+30
  %v190 = vsel %vm186, %v171, -1e+30
  %v191 = vstv %s178
  %v192 = vsub.s32 %v173, %v191
  %v193 = vsub.s32 %v174, %v191
  %194 = vset.pattern.permute.xlu0 0
  %195 = vperm.xlu0 %194, %v192
  %v196 = vpop.permute.xlu0 %195
  %197 = vset.pattern.permute.xlu0 0
  %198 = vperm.xlu0 %197, %v193
  %v199 = vpop.permute.xlu0 %198
  %vm200 = vcmp.eq.s32.totalorder %v176, %v196
  %vm201 = vcmp.eq.s32.totalorder %v177, %v196
  %vm202 = vcmp.eq.s32.totalorder %v176, %v199
  %vm203 = vcmp.eq.s32.totalorder %v177, %v199
  %v204 = vld [vmem:[#allocation4] sm:$0xff]
  %v205 = vld [vmem:[#allocation4 + $0x8] sm:$0xff]
  %v206 = vsel %vm200, %v187, 0.0
  %v207 = vsel %vm201, %v188, 0.0
  %v208 = vsel %vm202, %v189, 0.0
  %v209 = vsel %vm203, %v190, 0.0
  %v210 = vadd.f32 %v206, %v207
  %211 = vadd.xlane.f32.xlu0 %v210
  %v212 = vpop.xlane.xlu0 %211
  %v213 = vadd.f32 %v208, %v209
  %214 = vadd.xlane.f32.xlu0 %v213
  %v215 = vpop.xlane.xlu0 %214
  %v216 = vadd.f32 %v204, %v212
  %v217 = vadd.f32 %v205, %v215
  %vm218 = vcmask 7168
  %219 = vst.msk [vmem:[#allocation4] sm:$0xff] %vm218, %v216
  %220 = vst.msk [vmem:[#allocation4 + $0x8] sm:$0xff] %vm218, %v217
  %v221 = vld [vmem:[#allocation2] sm:$0xff]
  %v222 = vld [vmem:[#allocation2 + $0x8] sm:$0xff]
  %v223 = vmax.f32 %v187, %v188
  %224 = vmax.xlane.f32.xlu0 %v223
  %v225 = vpop.xlane.xlu0 %224
  %v226 = vmax.f32 %v189, %v190
  %227 = vmax.xlane.f32.xlu0 %v226
  %v228 = vpop.xlane.xlu0 %227
  %v229 = vmax.f32 %v221, %v225
  %v230 = vmax.f32 %v222, %v228
  %v231 = vld [vmem:[#allocation3] sm:$0xff]
  %v232 = vld [vmem:[#allocation3 + $0x8] sm:$0xff]
  %v233 = vsub.f32 %v221, %v229
  %v234 = vsub.f32 %v222, %v230
  %v235 = vmul.f32 %v233, 1.442695
  %v236 = vpow.pop %v235
  %v237 = vmul.f32 %v234, 1.442695
  %v238 = vpow.pop %v237
  %v239 = vmul.f32 %v231, %v236
  %v240 = vmul.f32 %v232, %v238
  %242 = vset.pattern.permute.xlu0 0
  %243 = vperm.xlu0 %242, %v229
  %v244 = vpop.permute.xlu0 %243
  %247 = vset.pattern.permute.xlu0 0
  %248 = vperm.xlu0 %247, %v230
  %v249 = vpop.permute.xlu0 %248
  %v251 = vsub.f32 %v187, %v244
  %v252 = vsub.f32 %v188, %v244
  %v253 = vsub.f32 %v189, %v249
  %v254 = vsub.f32 %v190, %v249
  %v255 = vmul.f32 %v251, 1.442695
  %v256 = vpow.pop %v255
  %v257 = vmul.f32 %v252, 1.442695
  %v258 = vpow.pop %v257
  %v259 = vmul.f32 %v253, 1.442695
  %v260 = vpow.pop %v259
  %v261 = vmul.f32 %v254, 1.442695
  %v262 = vpow.pop %v261
  %v263 = vadd.f32 %v256, %v258
  %264 = vadd.xlane.f32.xlu0 %v263
  %v265 = vpop.xlane.xlu0 %264
  %v266 = vadd.f32 %v260, %v262
  %267 = vadd.xlane.f32.xlu0 %v266
  %v268 = vpop.xlane.xlu0 %267
  %v269 = vadd.f32 %v239, %v265
  %v270 = vadd.f32 %v240, %v268
  %271 = vst.msk [vmem:[#allocation3] sm:$0xff] %vm218, %v269
  %272 = vst.msk [vmem:[#allocation3 + $0x8] sm:$0xff] %vm218, %v270
  %273 = vst.msk [vmem:[#allocation2] sm:$0xff] %vm218, %v229
  %274 = vst.msk [vmem:[#allocation2 + $0x8] sm:$0xff] %vm218, %v230
  // Predicated region
  $region18: #{_total_loss.3} parent=0 // pred_check
    %p275 = pneg %p15
  $region19: #{_total_loss.3} parent=0 // pred_check_branch
    %277 = sbr.rel (%p275) target = $region21
  $region20: #{_total_loss.3} parent=0 // pred_region
    %vm278 = vcmp.ne.s32.totalorder %v173, 4294967196
    %vm279 = vcmp.ne.s32.totalorder %v174, 4294967196
    %v280 = vld [vmem:[#allocation2] sm:$0xff]
    %v281 = vld [vmem:[#allocation2 + $0x8] sm:$0xff]
    %v282 = vld [vmem:[#allocation3] sm:$0xff]
    %v283 = vld [vmem:[#allocation3 + $0x8] sm:$0xff]
    %v284 = vlog2.pop %v282
    %v285 = vmul.f32 %v284, 0.6931472
    %v286 = vlog2.pop %v283
    %v287 = vmul.f32 %v286, 0.6931472
    %v288 = vadd.f32 %v280, %v285
    %v289 = vadd.f32 %v281, %v287
    %v290 = vld [vmem:[#allocation4] sm:$0xff]
    %v291 = vld [vmem:[#allocation4 + $0x8] sm:$0xff]
    %v292 = vsub.f32 %v288, %v290
    %v293 = vsub.f32 %v289, %v291
    %v294 = vsel %vm278, %v292, 0.0
    %v295 = vsel %vm279, %v293, 0.0
    %296 = vst.msk [vmem:[%s3] sm:$0xff] %vm218, %v294
    %297 = vst.msk [vmem:[%s3 + $0x8] sm:$0xff] %vm218, %v295
  $region21: #{_total_loss.3} parent=0 // pred_fallthru
    _
  // Predicated region
  $region22: #{_total_loss.3} parent=0 // pred_check
    _
  $region23: #{_total_loss.3} parent=0 // pred_check_branch
    %299 = sbr.rel (0) target = $region25
  $region24: #{_total_loss.3} parent=0 // pred_region
    _
  $region25: #{_total_loss.3} parent=0 // pred_fallthru
    _
  // Predicated region
  $region26: #{_total_loss.3} parent=0 // pred_check
    _
  $region27: #{_total_loss.3} parent=0 // pred_check_branch
    %301 = sbr.rel (0) target = $region29
  $region28: #{_total_loss.3} parent=0 // pred_region
    _
  $region29: #{_total_loss.3} parent=0 // pred_fallthru
    _

</llo_original>
